<compile_context>
chip_gen: v7x
topology: tpu7x:2x2x1
jax: 0.10.0
libtpu: 0.0.40
codegen_flags: <defaults>
</compile_context>

<pallas_src>
import functools

import jax
import jax.numpy as jnp
import numpy as np
from jax.experimental import pallas as pl
from jax.experimental.pallas import tpu as pltpu


# ----------------------------------------------------------------------------
# Tile-selection policy (single shared policy for pack time and call time)
# ----------------------------------------------------------------------------
_TM_MAX_SMALL_K = 2048          # fat row tiles for small-K layers (conv1, deconv4/5)
_TM_MAX_BIG_K = 512
_SMALL_K = 512
_TN_MAX = 1152                  # lets fc3 / deconv1 run few, fat N blocks
_TILE_BUDGET = 24 * 1024 * 1024  # per-operand VMEM budget (double-buffer + dequant temp)
_VMEM_LIMIT = 40 * 1024 * 1024   # < v7x's 64 MiB physical; ample on v5e/v6e (128 MiB)


def _round_up(x, m):
    return ((x + m - 1) // m) * m


def _select_tn(kp, n, wbytes):
    """Largest N tile that divides the 128-padded N and fits the VMEM budget."""
    np_pad = _round_up(n, 128)
    nb = np_pad // 128
    # VMEM per N tile: double-buffered weight storage plus (for int8 weights)
    # the in-kernel bf16 dequantization temporary.
    per_elem = 2 * wbytes + (2 if wbytes == 1 else 0)
    tn = 128
    for f in range(1, nb + 1):
        if nb % f:
            continue
        cand = 128 * f
        if cand > _TN_MAX:
            break
        if kp * cand * per_elem <= _TILE_BUDGET:
            tn = cand
    return tn, np_pad


def _select_tm(m, kp):
    tm_max = _TM_MAX_SMALL_K if kp <= _SMALL_K else _TM_MAX_BIG_K
    tm = min(tm_max, _round_up(m, 16))
    while tm > 16 and kp * tm * 2 * 2 > _TILE_BUDGET:       # bf16, double-buffered
        tm = max(16, _round_up(tm // 2, 16))
    return tm


# ----------------------------------------------------------------------------
# Pallas kernels: single-K-block matmul with fused bias + activation
# ----------------------------------------------------------------------------
def _apply_act(r, act):
    if act == "relu":
        return jnp.maximum(r, 0.0)
    if act == "sigmoid":
        return jax.nn.sigmoid(r)
    return r


def _mm_bias_act_kernel(a_ref, w_ref, bias_ref, o_ref, *, act):
    # Whole-K reduction in one block: dot + bias + activation -> output tile.
    r = jnp.dot(a_ref[...], w_ref[...], preferred_element_type=jnp.float32)
    r = r + bias_ref[...]
    o_ref[...] = _apply_act(r, act).astype(o_ref.dtype)


def _mm_q_bias_act_kernel(a_ref, w_ref, scale_ref, bias_ref, o_ref, *, act):
    # int8 weights: dequantize to bf16 for the MXU (portable across v5e/v6e/v7x)
    # and fold the per-column f32 scale into the epilogue.
    w = w_ref[...].astype(jnp.bfloat16)
    r = jnp.dot(a_ref[...], w, preferred_element_type=jnp.float32)
    r = r * scale_ref[...] + bias_ref[...]
    o_ref[...] = _apply_act(r, act).astype(o_ref.dtype)


def matmul_bias_act(a, pw, n_out, act, out_dtype=jnp.bfloat16):
    """(M, K) activations @ pre-packed (Kp, Np) weights + bias, fused act.

    pw["w"] is (Kp, Np) bf16 or int8 (then pw["s"] holds per-column f32 scales);
    pw["b"] is (1, Np) f32.  Only the activation matrix is padded per call.
    """
    m, k = a.shape
    w = pw["w"]
    bias = pw["b"]
    scale = pw.get("s")
    kp, np_pad = w.shape
    wbytes = 1 if w.dtype == jnp.int8 else 2
    tn, _ = _select_tn(kp, np_pad, wbytes)
    tm = _select_tm(m, kp)
    mp = _round_up(m, tm)

    a = a.astype(jnp.bfloat16)
    if mp != m or kp != k:
        a = jnp.pad(a, ((0, mp - m), (0, kp - k)))

    m_blocks, n_blocks = mp // tm, np_pad // tn

    # Grid-order guard (review): keep whichever operand would otherwise be
    # re-streamed more often resident across the inner grid axis.
    w_bytes_tot = kp * np_pad * wbytes
    a_bytes_tot = mp * kp * 2
    n_outer = (m_blocks > 1 and n_blocks > 1 and
               w_bytes_tot * (m_blocks - 1) > a_bytes_tot * (n_blocks - 1))
    if n_outer:
        grid = (n_blocks, m_blocks)
        a_map = lambda jn, im: (im, 0)
        w_map = lambda jn, im: (0, jn)
        v_map = lambda jn, im: (0, jn)
        o_map = lambda jn, im: (im, jn)
    else:
        grid = (m_blocks, n_blocks)
        a_map = lambda im, jn: (im, 0)
        w_map = lambda im, jn: (0, jn)
        v_map = lambda im, jn: (0, jn)
        o_map = lambda im, jn: (im, jn)

    in_specs = [pl.BlockSpec((tm, kp), a_map),
                pl.BlockSpec((kp, tn), w_map)]
    operands = [a, w]
    if scale is not None:
        kernel = functools.partial(_mm_q_bias_act_kernel, act=act)
        in_specs.append(pl.BlockSpec((1, tn), v_map))
        operands.append(scale)
    else:
        kernel = functools.partial(_mm_bias_act_kernel, act=act)
    in_specs.append(pl.BlockSpec((1, tn), v_map))
    operands.append(bias)

    out = pl.pallas_call(
        kernel,
        out_shape=jax.ShapeDtypeStruct((mp, np_pad), out_dtype),
        grid_spec=pltpu.PrefetchScalarGridSpec(
            num_scalar_prefetch=0,
            grid=grid,
            in_specs=in_specs,
            out_specs=pl.BlockSpec((tm, tn), o_map),
        ),
        compiler_params=pltpu.CompilerParams(
            dimension_semantics=("parallel", "parallel"),
            vmem_limit_bytes=_VMEM_LIMIT,
        ),
    )(*operands)
    return out[:m, :n_out]


# ----------------------------------------------------------------------------
# im2col + conv / sub-pixel conv-transpose wrappers (glue around the kernel)
# ----------------------------------------------------------------------------
def _im2col(x, k, stride):
    """x: (B, H, W, C) -> patches: (B*OH*OW, K*K*C), ordered (kh, kw, c)."""
    b, h, w, c = x.shape
    oh = (h - k) // stride + 1
    ow = (w - k) // stride + 1
    cols = []
    for i in range(k):
        for j in range(k):
            cols.append(
                x[:, i: i + stride * (oh - 1) + 1: stride,
                     j: j + stride * (ow - 1) + 1: stride, :])
    patches = jnp.concatenate(cols, axis=-1)              # (B, OH, OW, K*K*C)
    return patches.reshape(b * oh * ow, k * k * c), (b, oh, ow)


def conv2d(x, pw, cout, k, stride, act, out_dtype=jnp.bfloat16):
    patches, (b, oh, ow) = _im2col(x.astype(jnp.bfloat16), k, stride)
    y = matmul_bias_act(patches, pw, cout, act, out_dtype)
    return y.reshape(b, oh, ow, cout)


def conv_transpose2d_subpixel(x, pw, cout, k, stride, act, out_dtype=jnp.bfloat16):
    """Sub-pixel transposed conv: one stride-1 conv with ceil(k/s)^2 taps on the
    un-dilated input produces all s*s output phases (packed along N), which are
    then interleaved and cropped to the true output size (h-1)*s + k."""
    b, h, w, _ = x.shape
    s = stride
    t = -(-k // s)                                         # ceil(k / s)
    xp = jnp.pad(x.astype(jnp.bfloat16),
                 ((0, 0), (t - 1, t - 1), (t - 1, t - 1), (0, 0)))
    patches, (b, hp, wp) = _im2col(xp, t, 1)               # hp = h + t - 1
    y = matmul_bias_act(patches, pw, s * s * cout, act, out_dtype)
    y = y.reshape(b, hp, wp, s, s, cout)
    y = jnp.transpose(y, (0, 1, 3, 2, 4, 5)).reshape(b, s * hp, s * wp, cout)
    oh = (h - 1) * s + k
    ow = (w - 1) * s + k
    return y[:, :oh, :ow, :]


def deconv_from_vec(hvec, pw, cout, k, act, out_dtype=jnp.bfloat16):
    """ConvTranspose2d on a 1x1 spatial input == a Linear to (K, K, Cout)."""
    y = matmul_bias_act(hvec, pw, k * k * cout, act, out_dtype)
    return y.reshape(-1, k, k, cout)


# ----------------------------------------------------------------------------
# One-time weight packing (transpose / flip / pad / cast / quantize) -- no jit
# ----------------------------------------------------------------------------
def _pack_matmul(wk, bias, quantize=False):
    k, n = wk.shape
    kp = _round_up(k, 128)
    wbytes = 1 if quantize else 2
    _, np_pad = _select_tn(kp, n, wbytes)
    bias_p = jnp.pad(bias.astype(jnp.float32), (0, np_pad - n)).reshape(1, np_pad)
    if quantize:
        amax = jnp.maximum(jnp.max(jnp.abs(wk), axis=0), 1e-8)   # per output column
        scale = (amax / 127.0).astype(jnp.float32)
        q = jnp.clip(jnp.round(wk / scale), -127, 127).astype(jnp.int8)
        w_p = jnp.pad(q, ((0, kp - k), (0, np_pad - n)))
        s_p = jnp.pad(scale, (0, np_pad - n), constant_values=1.0).reshape(1, np_pad)
        return {"w": w_p, "s": s_p, "b": bias_p}
    w_p = jnp.pad(wk, ((0, kp - k), (0, np_pad - n))).astype(jnp.bfloat16)
    return {"w": w_p, "b": bias_p}


def _pack_conv(w, b):
    cout, cin, k, _ = w.shape                              # PyTorch (Cout,Cin,K,K)
    wk = jnp.transpose(w, (2, 3, 1, 0)).reshape(k * k * cin, cout)
    return _pack_matmul(wk, b)


def _pack_deconv_vec(w, b, quantize=False):
    cin, cout, k, _ = w.shape                              # PyTorch (Cin,Cout,K,K)
    wk = jnp.transpose(w, (0, 2, 3, 1)).reshape(cin, k * k * cout)
    bk = jnp.broadcast_to(b, (k * k, cout)).reshape(-1)
    return _pack_matmul(wk, bk, quantize=quantize)


def _pack_deconv_sub(w, b, s):
    cin, cout, k, _ = w.shape
    t = -(-k // s)
    # Pad taps to s*t so every phase has t taps (extra taps are zero).
    w_pad = jnp.pad(w, ((0, 0), (0, 0), (0, s * t - k), (0, s * t - k)))
    # kh = s*tt + p; patch offset u uses tap index tt = t-1-u (flip), same for kw.
    wr = w_pad.reshape(cin, cout, t, s, t, s)[:, :, ::-1, :, ::-1, :]
    # axes now: (ci, co, u, p, v, q) -> (u, v, ci, p, q, co)
    wk = jnp.transpose(wr, (2, 4, 0, 3, 5, 1)).reshape(t * t * cin, s * s * cout)
    bk = jnp.broadcast_to(b, (s * s, cout)).reshape(-1)
    return _pack_matmul(wk, bk)


def pack_params(params, quantize_deconv1=True):
    pk = {
        "conv1": _pack_conv(params["conv1_w"], params["conv1_b"]),
        "conv2": _pack_conv(params["conv2_w"], params["conv2_b"]),
        "conv3": _pack_conv(params["conv3_w"], params["conv3_b"]),
        "conv4": _pack_conv(params["conv4_w"], params["conv4_b"]),
        # fc1 + fc2 fused along N (mu | logvar) into one 128-wide padded tile.
        "fc12": _pack_matmul(
            jnp.concatenate([params["fc1_w"].T, params["fc2_w"].T], axis=1),
            jnp.concatenate([params["fc1_b"], params["fc2_b"]])),
        "fc3": _pack_matmul(params["fc3_w"].T, params["fc3_b"]),
        # deconv1's 9216x3200 weight is the dominant HBM stream -> int8 + scale.
        "deconv1": _pack_deconv_vec(params["deconv1_w"], params["deconv1_b"],
                                    quantize=quantize_deconv1),
        "deconv2": _pack_deconv_sub(params["deconv2_w"], params["deconv2_b"], 2),
        "deconv3": _pack_deconv_sub(params["deconv3_w"], params["deconv3_b"], 2),
        "deconv4": _pack_deconv_sub(params["deconv4_w"], params["deconv4_b"], 2),
        "deconv5": _pack_deconv_sub(params["deconv5_w"], params["deconv5_b"], 2),
    }
    return pk


# ----------------------------------------------------------------------------
# ConvVAE forward (packed params)
# ----------------------------------------------------------------------------
def conv_vae_forward(x_nchw, pk, eps):
    x = jnp.transpose(x_nchw, (0, 2, 3, 1))                          # -> NHWC

    # encoder (bf16 intermediates, f32 MXU accumulation inside the kernel)
    h = conv2d(x, pk["conv1"], 64, 6, 2, "relu")                     # (B,64,64,64)
    h = conv2d(h, pk["conv2"], 64, 6, 2, "relu")                     # (B,30,30,64)
    h = conv2d(h, pk["conv3"], 128, 4, 2, "relu")                    # (B,14,14,128)
    h = conv2d(h, pk["conv4"], 256, 4, 2, "relu")                    # (B,6,6,256)
    b = h.shape[0]
    # flatten in PyTorch (C, H, W) order
    h_flat = jnp.transpose(h, (0, 3, 1, 2)).reshape(b, 256 * 6 * 6)

    zdim = eps.shape[1]
    ml = matmul_bias_act(h_flat, pk["fc12"], 2 * zdim, "none", jnp.float32)
    mu, logvar = ml[:, :zdim], ml[:, zdim:]

    # Reparameterization: tiny (B, zdim) elementwise op -- plain jnp (a
    # pallas_call launch would cost more than the work).
    z = eps * jnp.exp(0.5 * logvar) + mu

    # decoder
    h3 = matmul_bias_act(z, pk["fc3"], 256 * 6 * 6, "none")
    d = deconv_from_vec(h3, pk["deconv1"], 128, 5, "relu")                           # (B,5,5,128)
    d = conv_transpose2d_subpixel(d, pk["deconv2"], 64, 5, 2, "relu")                # (B,13,13,64)
    d = conv_transpose2d_subpixel(d, pk["deconv3"], 32, 5, 2, "relu")                # (B,29,29,32)
    d = conv_transpose2d_subpixel(d, pk["deconv4"], 16, 6, 2, "relu")                # (B,62,62,16)
    d = conv_transpose2d_subpixel(d, pk["deconv5"], 3, 6, 2, "sigmoid", jnp.float32)  # (B,128,128,3)

    recon = jnp.transpose(d, (0, 3, 1, 2)).astype(jnp.float32)       # back to NCHW
    return recon, mu, logvar


# ----------------------------------------------------------------------------
# Correctness self-checks (conv + sub-pixel transposed conv vs XLA references)
# ----------------------------------------------------------------------------
def _ref_conv2d(x, w, b, stride):
    wt = jnp.transpose(w, (2, 3, 1, 0))                    # HWIO
    y = jax.lax.conv_general_dilated(
        x, wt, window_strides=(stride, stride), padding="VALID",
        dimension_numbers=("NHWC", "HWIO", "NHWC"))
    return y + b


def _ref_conv_transpose2d(x, w, b, stride):
    # nn.ConvTranspose2d == lhs-dilated conv with the spatially flipped kernel.
    _, _, k, _ = w.shape
    wt = jnp.transpose(w[:, :, ::-1, ::-1], (2, 3, 0, 1))  # HWIO
    y = jax.lax.conv_general_dilated(
        x, wt, window_strides=(1, 1),
        padding=[(k - 1, k - 1), (k - 1, k - 1)],
        lhs_dilation=(stride, stride),
        dimension_numbers=("NHWC", "HWIO", "NHWC"))
    return y + b


def _self_check(key):
    # Regular conv path.
    kx, kw, kb = jax.random.split(key, 3)
    x = jax.random.normal(kx, (1, 16, 16, 4), jnp.float32)
    w = jax.random.normal(kw, (8, 4, 6, 6), jnp.float32) / 12.0
    b = 0.01 * jax.random.normal(kb, (8,), jnp.float32)
    xq = x.astype(jnp.bfloat16).astype(jnp.float32)
    wq = w.astype(jnp.bfloat16).astype(jnp.float32)
    got = conv2d(x, _pack_conv(w, b), 8, 6, 2, "none", jnp.float32)
    ref = _ref_conv2d(xq, wq, b, 2)
    assert float(jnp.max(jnp.abs(got - ref))) < 2e-2

    # Sub-pixel transposed conv, both kernel sizes used by the decoder.
    for k in (5, 6):
        kx2, kw2, kb2 = jax.random.split(jax.random.fold_in(key, k), 3)
        x = jax.random.normal(kx2, (1, 7, 7, 8), jnp.float32)
        w = jax.random.normal(kw2, (8, 4, k, k), jnp.float32) / float(8 * k * k) ** 0.5
        b = 0.01 * jax.random.normal(kb2, (4,), jnp.float32)
        xq = x.astype(jnp.bfloat16).astype(jnp.float32)
        wq = w.astype(jnp.bfloat16).astype(jnp.float32)
        got = conv_transpose2d_subpixel(x, _pack_deconv_sub(w, b, 2), 4, k, 2,
                                        "none", jnp.float32)
        ref = _ref_conv_transpose2d(xq, wq, b, 2)
        assert float(jnp.max(jnp.abs(got - ref))) < 2e-2


def _quantized_path_supported():
    """Smoke-test the int8-dequant kernel; fall back to bf16 weights if it
    cannot be lowered on the current backend."""
    try:
        a = jnp.ones((16, 128), jnp.bfloat16)
        pw = _pack_matmul(jnp.eye(128, dtype=jnp.float32),
                          jnp.zeros((128,), jnp.float32), quantize=True)
        jax.block_until_ready(matmul_bias_act(a, pw, 128, "none", jnp.float32))
        return True
    except Exception:
        return False


# ----------------------------------------------------------------------------
# Deterministic parameter initialization (PyTorch shapes)
# ----------------------------------------------------------------------------
def init_params(key, z_dim):
    params = {}
    keys = iter(jax.random.split(key, 64))

    def conv_p(name, cout, cin, k):
        fan_in = cin * k * k
        params[name + "_w"] = jax.random.normal(
            next(keys), (cout, cin, k, k), jnp.float32) / np.sqrt(fan_in)
        params[name + "_b"] = 0.01 * jax.random.normal(next(keys), (cout,), jnp.float32)

    def deconv_p(name, cin, cout, k):
        fan_in = cin * k * k
        params[name + "_w"] = jax.random.normal(
            next(keys), (cin, cout, k, k), jnp.float32) / np.sqrt(fan_in)
        params[name + "_b"] = 0.01 * jax.random.normal(next(keys), (cout,), jnp.float32)

    def linear_p(name, fout, fin):
        params[name + "_w"] = jax.random.normal(
            next(keys), (fout, fin), jnp.float32) / np.sqrt(fin)
        params[name + "_b"] = 0.01 * jax.random.normal(next(keys), (fout,), jnp.float32)

    conv_p("conv1", 64, 4, 6)
    conv_p("conv2", 64, 64, 6)
    conv_p("conv3", 128, 64, 4)
    conv_p("conv4", 256, 128, 4)
    linear_p("fc1", z_dim, 256 * 6 * 6)
    linear_p("fc2", z_dim, 256 * 6 * 6)
    linear_p("fc3", 256 * 6 * 6, z_dim)
    deconv_p("deconv1", 256 * 6 * 6, 128, 5)
    deconv_p("deconv2", 128, 64, 5)
    deconv_p("deconv3", 64, 32, 5)
    deconv_p("deconv4", 32, 16, 6)
    deconv_p("deconv5", 16, 3, 6)
    return params


# ----------------------------------------------------------------------------
if __name__ == "__main__":
    B, Z_DIM = 2, 32
    # 132x132 input is forced by the hard-coded 256*6*6 flatten in the module.
    key = jax.random.PRNGKey(0)
    k_param, k_x, k_eps, k_test = jax.random.split(key, 4)

    # Validate the conv / sub-pixel transposed-conv lowerings vs XLA references.
    _self_check(k_test)

    params = init_params(k_param, Z_DIM)
    use_int8 = _quantized_path_supported()
    packed = pack_params(params, quantize_deconv1=use_int8)  # one-time, outside jit
    packed = jax.block_until_ready(packed)

    x = jax.random.normal(k_x, (B, 4, 132, 132), jnp.float32)
    eps = jax.random.normal(k_eps, (B, Z_DIM), jnp.float32)

    fwd = jax.jit(conv_vae_forward)
    recon, mu, logvar = fwd(x, packed, eps)
    jax.block_until_ready((recon, mu, logvar))

    assert recon.shape == (B, 3, 128, 128), recon.shape
    assert mu.shape == (B, Z_DIM) and logvar.shape == (B, Z_DIM)
    assert bool(jnp.all(jnp.isfinite(recon)))
    assert bool(jnp.all((recon >= 0.0) & (recon <= 1.0)))  # sigmoid output
    print("KERNEL_OK")
</pallas_src>

<mosaic_0001>
module attributes {stable_mosaic.version = 11 : i64} {
  func.func @_mm_bias_act_kernel(%arg0: i32, %arg1: i32, %arg2: memref<48x256xbf16, #tpu.memory_space<vmem>>, %arg3: memref<256x128xbf16, #tpu.memory_space<vmem>>, %arg4: memref<1x128xf32, #tpu.memory_space<vmem>>, %arg5: memref<48x128xf32, #tpu.memory_space<vmem>>) attributes {dimension_semantics = [#tpu.dimension_semantics<parallel>, #tpu.dimension_semantics<parallel>], iteration_bounds = array<i64: 1, 1>, scalar_prefetch = 0 : i64, scratch_operands = 0 : i64, tpu.core_type = #tpu.core_type<tc>, window_params = [{transform_indices = @transform_0, window_bounds = array<i64: 48, 256>}, {transform_indices = @transform_1, window_bounds = array<i64: 256, 128>}, {transform_indices = @transform_2, window_bounds = array<i64: 1, 128>}, {transform_indices = @transform_3, window_bounds = array<i64: 48, 128>}]} {
    %c0 = arith.constant 0 : index
    %c0_0 = arith.constant 0 : index
    %0 = vector.load %arg2[%c0, %c0_0] : memref<48x256xbf16, #tpu.memory_space<vmem>>, vector<48x256xbf16>
    %c0_1 = arith.constant 0 : index
    %c0_2 = arith.constant 0 : index
    %1 = vector.load %arg3[%c0_1, %c0_2] : memref<256x128xbf16, #tpu.memory_space<vmem>>, vector<256x128xbf16>
    %cst = arith.constant dense<0.000000e+00> : vector<48x128xf32>
    %2 = tpu.matmul %0, %1, %cst {dimension_numbers = #tpu.dot_dimension_numbers<[1], [0], [0], [1], [0, 0, 1, 1], [], []>} : vector<48x256xbf16>, vector<256x128xbf16>, vector<48x128xf32> -> vector<48x128xf32>
    %c0_3 = arith.constant 0 : index
    %c0_4 = arith.constant 0 : index
    %3 = vector.load %arg4[%c0_3, %c0_4] : memref<1x128xf32, #tpu.memory_space<vmem>>, vector<1x128xf32>
    %4 = vector.broadcast %3 : vector<1x128xf32> to vector<48x128xf32>
    %5 = arith.addf %2, %4 : vector<48x128xf32>
    %c0_5 = arith.constant 0 : index
    %c0_6 = arith.constant 0 : index
    %6 = vector.load %arg5[%c0_5, %c0_6] : memref<48x128xf32, #tpu.memory_space<vmem>>, vector<48x128xf32>
    tpu.vector_store %arg5[%c0_5, %c0_6], %5 {strides = array<i32>} : memref<48x128xf32, #tpu.memory_space<vmem>>, vector<48x128xf32>,
    return
  }
  func.func @transform_0(%arg0: i32, %arg1: i32) -> (i32, i32) {
    %c0_i32 = arith.constant 0 : i32
    %c0_i32_0 = arith.constant 0 : i32
    return %arg0, %c0_i32 : i32, i32
  }
  func.func @transform_1(%arg0: i32, %arg1: i32) -> (i32, i32) {
    %c0_i32 = arith.constant 0 : i32
    %c0_i32_0 = arith.constant 0 : i32
    return %c0_i32, %arg1 : i32, i32
  }
  func.func @transform_2(%arg0: i32, %arg1: i32) -> (i32, i32) {
    %c0_i32 = arith.constant 0 : i32
    %c0_i32_0 = arith.constant 0 : i32
    return %c0_i32, %arg1 : i32, i32
  }
  func.func @transform_3(%arg0: i32, %arg1: i32) -> (i32, i32) {
    %c0_i32 = arith.constant 0 : i32
    return %arg0, %arg1 : i32, i32
  }
}

</mosaic_0001>

<llo_original>
// kernel: tpu_custom_call.1
$region0: #{tpu_custom_call.1}
  #allocation0 [shape = 'u32[]', space=smem, size = 0x4, offset = 0x4, fixed_abs, tag = 'smem constant byte address 0x4 - core index']
  #allocation1 [shape = 'u32[144,128]{1,0:T(1,128)}', space=vmem, size = 0x12000, scoped, tag = 'internal scratch']
  %s0 = inlined_call_operand.hbm [shape: bf16[48,256], index: 0, kind: input, shape index: {}]
  %s1 = inlined_call_operand.hbm [shape: bf16[256,128], index: 1, kind: input, shape index: {}]
  %s2 = inlined_call_operand.vmem [shape: f32[1,128], index: 2, kind: input, shape index: {}]
  %s3 = inlined_call_operand.hbm [shape: f32[48,128], index: 3, kind: output, shape index: {}]
  %s4 = sld [smem:[#allocation0]]
  $region30: #{tpu_custom_call.1} parent=0
    _
  %s6 = ssub.s32 1, %s4
  %s7 = scalar_select 0, %s6, %s4
  $region1: #{tpu_custom_call.1} parent=0
    #allocation2 [shape = 'u8[24576]{0}', space=vmem, size = 0x6000, scoped, tag = 'input window, operand 0, single buffered']
    #allocation3 [shape = 's32[1]{0}', space=sflag, size = 0x4, scoped, tag = 'scoped memory for tpu_custom_call.1']
    #allocation4 [shape = 's32[1]{0}', space=sflag, size = 0x4, scoped, tag = 'scoped memory for tpu_custom_call.1']
    #allocation5 [shape = 'u8[65536]{0}', space=vmem, size = 0x10000, scoped, tag = 'input window, operand 1, single buffered']
    #allocation6 [shape = 's32[1]{0}', space=sflag, size = 0x4, scoped, tag = 'scoped memory for tpu_custom_call.1']
    #allocation7 [shape = 'u8[24576]{0}', space=vmem, size = 0x6000, scoped, tag = 'output window, operand 0, single buffered']
    %8 = vsyncpa [#allocation3], 0
    %9 = vsyncpa [#allocation6], 0
    %10 = vsyncpa [#allocation4], 0
    // Predicated region
    $region2: #{tpu_custom_call.1} parent=1 // pred_check
      _
    $region3: #{tpu_custom_call.1} parent=1 // pred_check_branch
      %12 = sbr.rel (0) target = $region5
    $region4: #{tpu_custom_call.1} parent=1 // pred_region
      %s14 = ssub.s32 768, 768
      %15 = vsyncadd [#allocation3], %s14
      %s16 = sshll.u32 [#allocation2], 4
      %s17 = int_to_ptr.vmem [resolvable:$true] %s16
      %22 = dma.hbm_to_vmem [thread:$0]  %s0, 768, %s17, [#allocation3], 128, 128, 8
    $region5: #{tpu_custom_call.1} parent=1 // pred_fallthru
      _
    // Predicated region
    $region6: #{tpu_custom_call.1} parent=1 // pred_check
      _
    $region7: #{tpu_custom_call.1} parent=1 // pred_check_branch
      %24 = sbr.rel (0) target = $region9
    $region8: #{tpu_custom_call.1} parent=1 // pred_region
      %s26 = ssub.s32 2048, 2048
      %27 = vsyncadd [#allocation6], %s26
      %s28 = sshll.u32 [#allocation5], 4
      %s29 = int_to_ptr.vmem [resolvable:$true] %s28
      %34 = dma.hbm_to_vmem [thread:$0]  %s1, 2048, %s29, [#allocation6], 64, 64, 4
    $region9: #{tpu_custom_call.1} parent=1 // pred_fallthru
      _
    // Predicated region
    $region10: #{tpu_custom_call.1} parent=1 // pred_check
      _
    $region11: #{tpu_custom_call.1} parent=1 // pred_check_branch
      %36 = sbr.rel (0) target = $region13
    $region12: #{tpu_custom_call.1} parent=1 // pred_region
      _
    $region13: #{tpu_custom_call.1} parent=1 // pred_fallthru
      _
    // Predicated region
    $region14: #{tpu_custom_call.1} parent=1 // pred_check
      _
    $region15: #{tpu_custom_call.1} parent=1 // pred_check_branch
      %38 = sbr.rel (0) target = $region17
    $region16: #{tpu_custom_call.1} parent=1 // pred_region
      %39 = dma.done [#allocation3], 768
    $region17: #{tpu_custom_call.1} parent=1 // pred_fallthru
      _
    // Predicated region
    $region18: #{tpu_custom_call.1} parent=1 // pred_check
      _
    $region19: #{tpu_custom_call.1} parent=1 // pred_check_branch
      %41 = sbr.rel (0) target = $region21
    $region20: #{tpu_custom_call.1} parent=1 // pred_region
      %42 = dma.done [#allocation6], 2048
    $region21: #{tpu_custom_call.1} parent=1 // pred_fallthru
      _
    %v44 = vld [vmem:[#allocation2] sm:$0xff]
    %v45 = vld [vmem:[#allocation2 + $0x8] sm:$0xff]
    %v46 = vld [vmem:[#allocation2 + $0x10] sm:$0xff]
    %v47 = vld [vmem:[#allocation2 + $0x18] sm:$0xff]
    %v48 = vld [vmem:[#allocation2 + $0x20] sm:$0xff]
    %v49 = vld [vmem:[#allocation2 + $0x28] sm:$0xff]
    %v50 = vld [vmem:[#allocation5] sm:$0xf]
    %v51 = vld [vmem:[#allocation5 + $0x4] sm:$0xf]
    %v52 = vld [vmem:[#allocation5 + $0x8] sm:$0xf]
    %v53 = vld [vmem:[#allocation5 + $0xc] sm:$0xf]
    %v54 = vld [vmem:[#allocation5 + $0x10] sm:$0xf]
    %v55 = vld [vmem:[#allocation5 + $0x14] sm:$0xf]
    %v56 = vld [vmem:[#allocation5 + $0x18] sm:$0xf]
    %v57 = vld [vmem:[#allocation5 + $0x1c] sm:$0xf]
    %v58 = vld [vmem:[#allocation5 + $0x20] sm:$0xf]
    %v59 = vld [vmem:[#allocation5 + $0x24] sm:$0xf]
    %v60 = vld [vmem:[#allocation5 + $0x28] sm:$0xf]
    %v61 = vld [vmem:[#allocation5 + $0x2c] sm:$0xf]
    %v62 = vld [vmem:[#allocation5 + $0x30] sm:$0xf]
    %v63 = vld [vmem:[#allocation5 + $0x34] sm:$0xf]
    %v64 = vld [vmem:[#allocation5 + $0x38] sm:$0xf]
    %v65 = vld [vmem:[#allocation5 + $0x3c] sm:$0xf]
    %v66 = vld [vmem:[#allocation5 + $0x40] sm:$0xf]
    %v67 = vld [vmem:[#allocation5 + $0x44] sm:$0xf]
    %v68 = vld [vmem:[#allocation5 + $0x48] sm:$0xf]
    %v69 = vld [vmem:[#allocation5 + $0x4c] sm:$0xf]
    %v70 = vld [vmem:[#allocation5 + $0x50] sm:$0xf]
    %v71 = vld [vmem:[#allocation5 + $0x54] sm:$0xf]
    %v72 = vld [vmem:[#allocation5 + $0x58] sm:$0xf]
    %v73 = vld [vmem:[#allocation5 + $0x5c] sm:$0xf]
    %v74 = vld [vmem:[#allocation5 + $0x60] sm:$0xf]
    %v75 = vld [vmem:[#allocation5 + $0x64] sm:$0xf]
    %v76 = vld [vmem:[#allocation5 + $0x68] sm:$0xf]
    %v77 = vld [vmem:[#allocation5 + $0x6c] sm:$0xf]
    %v78 = vld [vmem:[#allocation5 + $0x70] sm:$0xf]
    %v79 = vld [vmem:[#allocation5 + $0x74] sm:$0xf]
    %v80 = vld [vmem:[#allocation5 + $0x78] sm:$0xf]
    %v81 = vld [vmem:[#allocation5 + $0x7c] sm:$0xf]
    %v82 = vld [vmem:[%s2] sm:$0x1]
    %v84 = vlaneseq
    %v85 = vshrl.u32 %v84, 7
    %v86 = vsub.s32 0, %v85
    %v87 = vrot.slane %v82, %v86
    %v95 = vunpack.c.l.b16 %v44
    %v96 = vunpack.c.h.b16 %v44
    %v97 = vunpack.c.l.b16 %v45
    %v98 = vunpack.c.h.b16 %v45
    %v99 = vunpack.c.l.b16 %v46
    %v100 = vunpack.c.h.b16 %v46
    %v101 = vunpack.c.l.b16 %v47
    %v102 = vunpack.c.h.b16 %v47
    %v103 = vunpack.c.l.b16 %v48
    %v104 = vunpack.c.h.b16 %v48
    %v105 = vunpack.c.l.b16 %v49
    %v106 = vunpack.c.h.b16 %v49
    %v107 = vpack.c.b16 %v97, %v95
    %v108 = vpack.c.b16 %v98, %v96
    %v109 = vpack.c.b16 %v101, %v99
    %v110 = vpack.c.b16 %v102, %v100
    %v111 = vpack.c.b16 %v105, %v103
    %v112 = vpack.c.b16 %v106, %v104
    %v151 = vunpack.c.l.b16 %v50
    %v152 = vunpack.c.l.b16 %v51
    %v153 = vunpack.c.l.b16 %v52
    %v154 = vunpack.c.l.b16 %v53
    %v155 = vunpack.c.l.b16 %v54
    %v156 = vunpack.c.l.b16 %v55
    %v157 = vunpack.c.l.b16 %v56
    %v158 = vunpack.c.l.b16 %v57
    %v159 = vunpack.c.l.b16 %v58
    %v160 = vunpack.c.l.b16 %v59
    %v161 = vunpack.c.l.b16 %v60
    %v162 = vunpack.c.l.b16 %v61
    %v163 = vunpack.c.l.b16 %v62
    %v164 = vunpack.c.l.b16 %v63
    %v165 = vunpack.c.l.b16 %v64
    %v166 = vunpack.c.l.b16 %v65
    %v167 = vunpack.c.l.b16 %v66
    %v168 = vunpack.c.l.b16 %v67
    %v169 = vunpack.c.l.b16 %v68
    %v170 = vunpack.c.l.b16 %v69
    %v171 = vunpack.c.l.b16 %v70
    %v172 = vunpack.c.l.b16 %v71
    %v173 = vunpack.c.l.b16 %v72
    %v174 = vunpack.c.l.b16 %v73
    %v175 = vunpack.c.l.b16 %v74
    %v176 = vunpack.c.l.b16 %v75
    %v177 = vunpack.c.l.b16 %v76
    %v178 = vunpack.c.l.b16 %v77
    %v179 = vunpack.c.l.b16 %v78
    %v180 = vunpack.c.l.b16 %v79
    %v181 = vunpack.c.l.b16 %v80
    %v182 = vunpack.c.l.b16 %v81
    %v183 = vpack.c.b16 %v152, %v151
    %v184 = vpack.c.b16 %v154, %v153
    %v185 = vpack.c.b16 %v156, %v155
    %v186 = vpack.c.b16 %v158, %v157
    %v187 = vpack.c.b16 %v160, %v159
    %v188 = vpack.c.b16 %v162, %v161
    %v189 = vpack.c.b16 %v164, %v163
    %v190 = vpack.c.b16 %v166, %v165
    %v191 = vpack.c.b16 %v168, %v167
    %v192 = vpack.c.b16 %v170, %v169
    %v193 = vpack.c.b16 %v172, %v171
    %v194 = vpack.c.b16 %v174, %v173
    %v195 = vpack.c.b16 %v176, %v175
    %v196 = vpack.c.b16 %v178, %v177
    %v197 = vpack.c.b16 %v180, %v179
    %v198 = vpack.c.b16 %v182, %v181
    %215 = vmatprep.subr.bf16.mxu0 0
    %216 = vmatpush1.bf16.msra.mxu0 %v183
    %217 = vmatprep.subr.bf16.mxu0 0
    %218 = vmatpush1.bf16.msra.mxu0 %v184
    %219 = vmatprep.subr.bf16.mxu0 0
    %220 = vmatpush1.bf16.msra.mxu0 %v185
    %221 = vmatprep.subr.bf16.mxu0 0
    %222 = vmatpush1.bf16.msra.mxu0 %v186
    %223 = vmatprep.subr.bf16.mxu0 0
    %224 = vmatpush1.bf16.msra.mxu0 %v187
    %225 = vmatprep.subr.bf16.mxu0 0
    %226 = vmatpush1.bf16.msra.mxu0 %v188
    %227 = vmatprep.subr.bf16.mxu0 0
    %228 = vmatpush1.bf16.msra.mxu0 %v189
    %229 = vmatprep.subr.bf16.mxu0 0
    %230 = vmatpush1.bf16.msra.mxu0 %v190
    %231 = vmatprep.subr.bf16.mxu0 0
    %232 = vmatpush1.bf16.msra.mxu0 %v191
    %233 = vmatprep.subr.bf16.mxu0 0
    %234 = vmatpush1.bf16.msra.mxu0 %v192
    %235 = vmatprep.subr.bf16.mxu0 0
    %236 = vmatpush1.bf16.msra.mxu0 %v193
    %237 = vmatprep.subr.bf16.mxu0 0
    %238 = vmatpush1.bf16.msra.mxu0 %v194
    %239 = vmatprep.subr.bf16.mxu0 0
    %240 = vmatpush1.bf16.msra.mxu0 %v195
    %241 = vmatprep.subr.bf16.mxu0 0
    %242 = vmatpush1.bf16.msra.mxu0 %v196
    %243 = vmatprep.subr.bf16.mxu0 0
    %244 = vmatpush1.bf16.msra.mxu0 %v197
    %245 = vmatprep.subr.bf16.mxu0 0
    %246 = vmatpush1.bf16.msra.mxu0 %v198
    %247 = vmatprep.mubr.bf16.mxu0 %v108
    %248 = vmatmul.mubr.bf16.gmra.mrb[0].mxu0 %v107
    %v249 = vpop.f32.mrb[0].mxu0
    %v250 = vadd.f32 %v87, %v249
    %v251 = vpop.f32.mrb[0].mxu0
    %v252 = vpop.f32.mrb[0].mxu0
    %v253 = vadd.f32 %v87, %v252
    %v254 = vpop.f32.mrb[0].mxu0
    %255 = vmatprep.mubr.bf16.mxu0 %v110
    %256 = vmatmul.mubr.bf16.gmra.mrb[0].mxu0 %v109
    %v257 = vpop.f32.mrb[0].mxu0
    %v258 = vadd.f32 %v87, %v257
    %v259 = vpop.f32.mrb[0].mxu0
    %v260 = vpop.f32.mrb[0].mxu0
    %v261 = vadd.f32 %v87, %v260
    %v262 = vpop.f32.mrb[0].mxu0
    %263 = vmatprep.mubr.bf16.mxu0 %v112
    %264 = vmatmul.mubr.bf16.gmra.mrb[0].mxu0 %v111
    %v265 = vpop.f32.mrb[0].mxu0
    %v266 = vadd.f32 %v87, %v265
    %v267 = vpop.f32.mrb[0].mxu0
    %v268 = vpop.f32.mrb[0].mxu0
    %v269 = vadd.f32 %v87, %v268
    %v270 = vpop.f32.mrb[0].mxu0
    %271 = vdwg.mxu0
    %272 = vst [vmem:[#allocation7] sm:$0xff] %v250
    %273 = vst [vmem:[#allocation7 + $0x8] sm:$0xff] %v253
    %274 = vst [vmem:[#allocation7 + $0x10] sm:$0xff] %v258
    %275 = vst [vmem:[#allocation7 + $0x18] sm:$0xff] %v261
    %276 = vst [vmem:[#allocation7 + $0x20] sm:$0xff] %v266
    %277 = vst [vmem:[#allocation7 + $0x28] sm:$0xff] %v269
    // Predicated region
    $region22: #{tpu_custom_call.1} parent=1 // pred_check
      _
    $region23: #{tpu_custom_call.1} parent=1 // pred_check_branch
      %279 = sbr.rel (0) target = $region25
    $region24: #{tpu_custom_call.1} parent=1 // pred_region
      %s281 = ssub.s32 768, 768
      %282 = vsyncadd [#allocation4], %s281
      %s283 = sshll.u32 [#allocation7], 4
      %s284 = int_to_ptr.vmem [resolvable:$true] %s283
      %289 = dma.vmem_to_hbm [thread:$0]  %s284, 768, %s3, [#allocation4], 128, 128, 8
    $region25: #{tpu_custom_call.1} parent=1 // pred_fallthru
      _
    // Predicated region
    $region26: #{tpu_custom_call.1} parent=1 // pred_check
      _
    $region27: #{tpu_custom_call.1} parent=1 // pred_check_branch
      %291 = sbr.rel (0) target = $region29
    $region28: #{tpu_custom_call.1} parent=1 // pred_region
      %292 = dma.done [#allocation4], 768
    $region29: #{tpu_custom_call.1} parent=1 // pred_fallthru
      _
    %293 = vsyncpa [#allocation3], 1
    %294 = vsyncpa [#allocation6], 1
    %295 = vsyncpa [#allocation4], 1

</llo_original>
